<compile_context>
chip_gen: v7x
topology: tpu7x:2x2x1
jax: 0.10.0
libtpu: 0.0.40
codegen_flags: <defaults>
</compile_context>

<pallas_src>
import functools

import jax
import jax.numpy as jnp
from jax import lax
from jax.experimental import pallas as pl
from jax.experimental.pallas import tpu as pltpu

_TARGET_BLOCK_BYTES = 4 << 20     # per-grid-step input block target (2-8 MiB sweet spot)
_FUSED_ROW_BYTES_MAX = 8 << 20    # above this, one row can't 4x-buffer -> two-pass path
_MIN_GRID_STEPS = 8               # >= 4 steps per TensorCore on v7x megacore
_LIVE_VREG_BUDGET = 96 * 1024     # live bytes allowed in the chunked loops (of 256 KiB)


def _round_up(n, m):
    return -(-n // m) * m


def _sublane(itemsize):
    return {1: 32, 2: 16, 4: 8}.get(itemsize, 8)


# --------------------------------------------------------------------------
# Fused path: pool + FC + sigmoid + scale in a single kernel (1 read + 1 write)
# --------------------------------------------------------------------------
def _fused_kernel(x_ref, w1_ref, w2_ref, o_ref, *, hw_chunk, n_full, tail,
                  inv_hw, unroll):
    # x_ref/o_ref: (bt, C, HW)   w1_ref: (C, Cr)   w2_ref: (Cr, C)
    bt, c, _ = x_ref.shape

    # ---- Pass 1: global average pool, streamed over lane chunks -----------
    # Elementwise f32 accumulator across chunks; a single cross-lane (XLU)
    # reduction per block.  The full slab is never upcast / materialized.
    pooled = jnp.zeros((bt, c), jnp.float32)
    if n_full > 0:
        def pool_body(i, acc):
            off = pl.multiple_of(i * hw_chunk, 128)
            return acc + x_ref[:, :, pl.ds(off, hw_chunk)].astype(jnp.float32)

        acc = lax.fori_loop(0, n_full, pool_body,
                            jnp.zeros((bt, c, hw_chunk), jnp.float32),
                            unroll=unroll)
        pooled = pooled + jnp.sum(acc, axis=-1)
    if tail > 0:
        xt = x_ref[:, :, pl.ds(n_full * hw_chunk, tail)].astype(jnp.float32)
        pooled = pooled + jnp.sum(xt, axis=-1)
    pooled = pooled * inv_hw

    # ---- Tiny FC: Linear -> ReLU -> Linear -> Sigmoid (f32) ---------------
    h = jnp.dot(pooled, w1_ref[...].astype(jnp.float32),
                preferred_element_type=jnp.float32)
    h = jnp.maximum(h, 0.0)
    z = jnp.dot(h, w2_ref[...].astype(jnp.float32),
                preferred_element_type=jnp.float32)
    gate = pl.reciprocal(1.0 + jnp.exp(-z))              # exact sigmoid, f32
    gate = gate.astype(o_ref.dtype)[:, :, None]          # bulk math in x dtype

    # ---- Pass 2: scale the input by the channel gate, streamed chunks -----
    if n_full > 0:
        def scale_body(i, carry):
            off = pl.multiple_of(i * hw_chunk, 128)
            o_ref[:, :, pl.ds(off, hw_chunk)] = (
                x_ref[:, :, pl.ds(off, hw_chunk)] * gate)
            return carry

        lax.fori_loop(0, n_full, scale_body, 0, unroll=unroll)
    if tail > 0:
        off = n_full * hw_chunk
        o_ref[:, :, pl.ds(off, tail)] = x_ref[:, :, pl.ds(off, tail)] * gate


def _fused(x3, w1, w2, *, itemsize, c_pad, row_bytes):
    B, C, HW = x3.shape
    Cr = w1.shape[1]

    # Batch-tile size: ~_TARGET_BLOCK_BYTES per step, >= _MIN_GRID_STEPS grid
    # steps when the batch allows, and bt | B so every block is full-sized.
    bt = max(1, min(B, _TARGET_BLOCK_BYTES // row_bytes))
    if B // bt < _MIN_GRID_STEPS:
        bt = min(bt, max(1, B // _MIN_GRID_STEPS))
    while B % bt:
        bt -= 1

    # Lane-chunk width: budget f32 accumulator + f32 upcast + raw chunk.
    per_lane_col = bt * c_pad * (8 + itemsize)
    max_chunk = (_LIVE_VREG_BUDGET // per_lane_col) // 128 * 128
    hw_chunk = max(128, min(max_chunk, (HW // 128) * 128))
    n_full = HW // hw_chunk
    tail = HW - n_full * hw_chunk
    unroll = max(1, min(n_full, 4))

    block_bytes = bt * row_bytes
    w_bytes = w1.size * w1.dtype.itemsize + w2.size * w2.dtype.itemsize
    needed = 4 * block_bytes + 4 * w_bytes + (4 << 20)
    vmem_limit = int(min(max(needed, 16 << 20), 56 << 20))

    kernel = functools.partial(
        _fused_kernel, hw_chunk=hw_chunk, n_full=n_full, tail=tail,
        inv_hw=float(1.0 / HW), unroll=unroll)

    return pl.pallas_call(
        kernel,
        out_shape=jax.ShapeDtypeStruct((B, C, HW), x3.dtype),
        grid=(B // bt,),
        in_specs=[
            pl.BlockSpec((bt, C, HW), lambda i: (i, 0, 0)),   # batch tile, full HW
            pl.BlockSpec((C, Cr), lambda i: (0, 0)),          # weights resident
            pl.BlockSpec((Cr, C), lambda i: (0, 0)),
        ],
        out_specs=pl.BlockSpec((bt, C, HW), lambda i: (i, 0, 0)),
        compiler_params=pltpu.CompilerParams(
            dimension_semantics=("parallel",),
            vmem_limit_bytes=vmem_limit),
    )(x3, w1, w2)


# --------------------------------------------------------------------------
# Fallback path: two streamed HBM passes when one (C, HW) row is too big
# --------------------------------------------------------------------------
def _pool_sum_kernel(x_ref, psum_ref, *, hw, hw_block, hw_chunk, n_full, tail,
                     unroll):
    # x_ref: (1, C, hwb)   psum_ref: (1, C, 1) f32 accumulator across hw blocks
    j = pl.program_id(1)

    @pl.when(j == 0)
    def _():
        psum_ref[...] = jnp.zeros_like(psum_ref)

    bt, c, _ = x_ref.shape
    base = j * hw_block

    def masked_chunk(off, size):
        xc = x_ref[:, :, pl.ds(off, size)].astype(jnp.float32)
        lane = lax.broadcasted_iota(jnp.int32, xc.shape, 2)
        # Mask the ragged last HW block (out-of-bounds block lanes hold garbage).
        return jnp.where(base + off + lane < hw, xc, 0.0)

    partial = jnp.zeros((bt, c, 1), jnp.float32)
    if n_full > 0:
        def body(i, acc):
            off = pl.multiple_of(i * hw_chunk, 128)
            return acc + masked_chunk(off, hw_chunk)

        acc = lax.fori_loop(0, n_full, body,
                            jnp.zeros((bt, c, hw_chunk), jnp.float32),
                            unroll=unroll)
        partial = partial + jnp.sum(acc, axis=-1, keepdims=True)
    if tail > 0:
        partial = partial + jnp.sum(masked_chunk(n_full * hw_chunk, tail),
                                    axis=-1, keepdims=True)
    psum_ref[...] += partial


def _scale_kernel(x_ref, gate_ref, o_ref, *, hw_chunk, n_full, tail, unroll):
    # x_ref/o_ref: (1, C, hwb)   gate_ref: (1, C, 1) in x dtype.
    # No tail mask needed: out-of-bounds writes of the ragged block are dropped.
    gate = gate_ref[...]

    if n_full > 0:
        def body(i, carry):
            off = pl.multiple_of(i * hw_chunk, 128)
            o_ref[:, :, pl.ds(off, hw_chunk)] = (
                x_ref[:, :, pl.ds(off, hw_chunk)] * gate)
            return carry

        lax.fori_loop(0, n_full, body, 0, unroll=unroll)
    if tail > 0:
        off = n_full * hw_chunk
        o_ref[:, :, pl.ds(off, tail)] = x_ref[:, :, pl.ds(off, tail)] * gate


def _two_pass(x3, w1, w2, *, itemsize, c_pad, target_bytes):
    B, C, HW = x3.shape
    hw128 = _round_up(HW, 128)

    # HW-block width: ~target_bytes per (1, C, hwb) block.  If the whole row
    # fits (or HW < 128), use the full spatial extent (block dim == full dim).
    if c_pad * hw128 * itemsize <= target_bytes or HW < 128:
        hwb, n_hw = HW, 1
    else:
        hwb_lanes = max(128, (target_bytes // (c_pad * itemsize)) // 128 * 128)
        hwb = min(hwb_lanes, (HW // 128) * 128)
        n_hw = pl.cdiv(HW, hwb)

    per_lane_col = c_pad * (8 + itemsize)
    max_chunk = (_LIVE_VREG_BUDGET // per_lane_col) // 128 * 128
    hw_chunk = max(128, min(max_chunk,
                            (hwb // 128) * 128 if hwb >= 128 else 128))
    n_full = hwb // hw_chunk
    tail = hwb - n_full * hw_chunk
    unroll = max(1, min(n_full, 4)) if n_full > 0 else 1

    block_bytes = c_pad * _round_up(hwb, 128) * itemsize
    vmem_limit = int(min(max(4 * block_bytes + (4 << 20), 16 << 20), 56 << 20))

    # Pass 1: per-(b, c) spatial sums, accumulated across the HW grid axis.
    pool_kernel = functools.partial(
        _pool_sum_kernel, hw=HW, hw_block=hwb, hw_chunk=hw_chunk,
        n_full=n_full, tail=tail, unroll=unroll)
    psum = pl.pallas_call(
        pool_kernel,
        out_shape=jax.ShapeDtypeStruct((B, C, 1), jnp.float32),
        grid=(B, n_hw),
        in_specs=[pl.BlockSpec((1, C, hwb), lambda b, j: (b, 0, j))],
        out_specs=pl.BlockSpec((1, C, 1), lambda b, j: (b, 0, 0)),
        compiler_params=pltpu.CompilerParams(
            dimension_semantics=("parallel", "arbitrary"),
            vmem_limit_bytes=vmem_limit),
    )(x3)

    # Tiny (B, C) FC -> gate in plain XLA (negligible next to the HBM passes).
    pooled = psum.reshape(B, C) * jnp.float32(1.0 / HW)
    h = jnp.maximum(pooled @ w1.astype(jnp.float32), 0.0)
    gate = jax.nn.sigmoid(h @ w2.astype(jnp.float32))
    gate = gate.astype(x3.dtype).reshape(B, C, 1)

    # Pass 2: scale x by the per-channel gate.
    scale_kernel = functools.partial(
        _scale_kernel, hw_chunk=hw_chunk, n_full=n_full, tail=tail,
        unroll=unroll)
    return pl.pallas_call(
        scale_kernel,
        out_shape=jax.ShapeDtypeStruct((B, C, HW), x3.dtype),
        grid=(B, n_hw),
        in_specs=[pl.BlockSpec((1, C, hwb), lambda b, j: (b, 0, j)),
                  pl.BlockSpec((1, C, 1), lambda b, j: (b, 0, 0))],
        out_specs=pl.BlockSpec((1, C, hwb), lambda b, j: (b, 0, j)),
        compiler_params=pltpu.CompilerParams(
            dimension_semantics=("parallel", "parallel"),
            vmem_limit_bytes=vmem_limit),
    )(x3, gate)


# --------------------------------------------------------------------------
# Public wrapper
# --------------------------------------------------------------------------
def channel_attention(x_nchw, w1, w2, *, force_two_pass=False,
                      two_pass_block_bytes=None):
    """x_nchw: (B, C, H, W); w1: (C, C//r); w2: (C//r, C) -> (B, C, H, W)."""
    B, C, H, W = x_nchw.shape
    HW = H * W
    x3 = x_nchw.reshape(B, C, HW)                  # contiguous reshape: free

    itemsize = jnp.dtype(x_nchw.dtype).itemsize
    c_pad = _round_up(C, _sublane(itemsize))
    row_bytes = c_pad * _round_up(HW, 128) * itemsize   # VMEM bytes of one row

    if force_two_pass or row_bytes > _FUSED_ROW_BYTES_MAX:
        out3 = _two_pass(x3, w1, w2, itemsize=itemsize, c_pad=c_pad,
                         target_bytes=two_pass_block_bytes or _TARGET_BLOCK_BYTES)
    else:
        out3 = _fused(x3, w1, w2, itemsize=itemsize, c_pad=c_pad,
                      row_bytes=row_bytes)
    return out3.reshape(B, C, H, W)


def _reference(x_nchw, w1, w2):
    x32 = x_nchw.astype(jnp.float32)
    pooled = jnp.mean(x32, axis=(2, 3))                        # (B, C)
    h = jnp.maximum(pooled @ w1.astype(jnp.float32), 0.0)
    y = jax.nn.sigmoid(h @ w2.astype(jnp.float32))             # (B, C)
    return (x32 * y[:, :, None, None]).astype(x_nchw.dtype)


if __name__ == "__main__":
    # Shapes consistent with the module: in_channels=8, reduction=4.
    B, C, H, W = 2, 8, 16, 16
    reduction = 4
    Cr = C // reduction

    key = jax.random.PRNGKey(0)
    kx, k1, k2, kx2 = jax.random.split(key, 4)

    x = jax.random.normal(kx, (B, C, H, W), dtype=jnp.float32)
    # Linear(bias=False) weights, stored pre-transposed so the kernel computes
    # pooled @ w1 @ w2 (== PyTorch's pooled @ W1.T @ W2.T).
    w1 = jax.random.normal(k1, (C, Cr), dtype=jnp.float32) / jnp.sqrt(C)
    w2 = jax.random.normal(k2, (Cr, C), dtype=jnp.float32) / jnp.sqrt(Cr)

    ref = _reference(x, w1, w2)

    # Fused single-kernel path.
    out = jax.block_until_ready(channel_attention(x, w1, w2))
    assert out.shape == (B, C, H, W)
    assert jnp.allclose(out, ref, atol=1e-5, rtol=1e-5)

    # Non-128-multiple spatial size (10x10): handled fully in-kernel via a
    # static tail chunk — no wrapper pad, no output slice.
    x_odd = jax.random.normal(kx2, (B, C, 10, 10), dtype=jnp.float32)
    ref_odd = _reference(x_odd, w1, w2)
    out_odd = jax.block_until_ready(channel_attention(x_odd, w1, w2))
    assert out_odd.shape == (B, C, 10, 10)
    assert jnp.allclose(out_odd, ref_odd, atol=1e-5, rtol=1e-5)

    # Large-activation fallback (pool kernel + tiny XLA FC + scale kernel),
    # exercised explicitly on small shapes.
    out_tp = jax.block_until_ready(
        channel_attention(x, w1, w2, force_two_pass=True))
    assert jnp.allclose(out_tp, ref, atol=1e-5, rtol=1e-5)

    # Fallback with a tiny block budget on a 10x20 image: forces multiple HW
    # blocks with a ragged (masked) last block.
    x_rag = jax.random.normal(kx2, (B, C, 10, 20), dtype=jnp.float32)
    ref_rag = _reference(x_rag, w1, w2)
    out_rag = jax.block_until_ready(
        channel_attention(x_rag, w1, w2, force_two_pass=True,
                          two_pass_block_bytes=4096))
    assert jnp.allclose(out_rag, ref_rag, atol=1e-5, rtol=1e-5)

    print("KERNEL_OK")
</pallas_src>

<mosaic_0001>
module attributes {stable_mosaic.version = 11 : i64} {
  func.func @_fused_kernel(%arg0: i32, %arg1: memref<1x8x256xf32, #tpu.memory_space<vmem>>, %arg2: memref<8x2xf32, #tpu.memory_space<vmem>>, %arg3: memref<2x8xf32, #tpu.memory_space<vmem>>, %arg4: memref<1x8x256xf32, #tpu.memory_space<vmem>>) attributes {dimension_semantics = [#tpu.dimension_semantics<parallel>], iteration_bounds = array<i64: 2>, scalar_prefetch = 0 : i64, scratch_operands = 0 : i64, tpu.core_type = #tpu.core_type<tc>, window_params = [{transform_indices = @transform_0, window_bounds = array<i64: 1, 8, 256>}, {pipeline_mode = #tpu.pipeline_mode<synchronous>, transform_indices = @transform_1, window_bounds = array<i64: 8, 2>}, {pipeline_mode = #tpu.pipeline_mode<synchronous>, transform_indices = @transform_2, window_bounds = array<i64: 2, 8>}, {transform_indices = @transform_3, window_bounds = array<i64: 1, 8, 256>}]} {
    %cst = arith.constant 0.000000e+00 : f32
    %0 = vector.broadcast %cst : f32 to vector<1x8xf32>
    %cst_0 = arith.constant 0.000000e+00 : f32
    %1 = vector.broadcast %cst_0 : f32 to vector<1x8x256xf32>
    %c0_i32 = arith.constant 0 : i32
    %c256_i32 = arith.constant 256 : i32
    %2 = arith.muli %c0_i32, %c256_i32 : i32
    %3 = tpu.assume_multiple %2, 128 : i32
    %c0 = arith.constant 0 : index
    %c0_1 = arith.constant 0 : index
    %4 = arith.index_cast %3 : i32 to index
    %5 = vector.load %arg1[%c0, %c0_1, %4] : memref<1x8x256xf32, #tpu.memory_space<vmem>>, vector<1x8x256xf32>
    %6 = arith.addf %1, %5 : vector<1x8x256xf32>
    %c1_i32 = arith.constant 1 : i32
    %cst_2 = arith.constant dense<0.000000e+00> : vector<1x8xf32>
    %7 = vector.multi_reduction <add>, %6, %cst_2 [2] : vector<1x8x256xf32> to vector<1x8xf32>
    %8 = arith.addf %0, %7 : vector<1x8xf32>
    %cst_3 = arith.constant 3.906250e-03 : f32
    %9 = vector.broadcast %cst_3 : f32 to vector<1x8xf32>
    %10 = arith.mulf %8, %9 : vector<1x8xf32>
    %c0_4 = arith.constant 0 : index
    %c0_5 = arith.constant 0 : index
    %11 = vector.load %arg2[%c0_4, %c0_5] : memref<8x2xf32, #tpu.memory_space<vmem>>, vector<8x2xf32>
    %cst_6 = arith.constant dense<0.000000e+00> : vector<1x2xf32>
    %12 = tpu.matmul %10, %11, %cst_6 {dimension_numbers = #tpu.dot_dimension_numbers<[1], [0], [0], [1], [0, 0, 1, 1], [], []>} : vector<1x8xf32>, vector<8x2xf32>, vector<1x2xf32> -> vector<1x2xf32>
    %cst_7 = arith.constant 0.000000e+00 : f32
    %13 = vector.broadcast %cst_7 : f32 to vector<1x2xf32>
    %14 = arith.maximumf %12, %13 : vector<1x2xf32>
    %c0_8 = arith.constant 0 : index
    %c0_9 = arith.constant 0 : index
    %15 = vector.load %arg3[%c0_8, %c0_9] : memref<2x8xf32, #tpu.memory_space<vmem>>, vector<2x8xf32>
    %cst_10 = arith.constant dense<0.000000e+00> : vector<1x8xf32>
    %16 = tpu.matmul %14, %15, %cst_10 {dimension_numbers = #tpu.dot_dimension_numbers<[1], [0], [0], [1], [0, 0, 1, 1], [], []>} : vector<1x2xf32>, vector<2x8xf32>, vector<1x8xf32> -> vector<1x8xf32>
    %cst_11 = arith.constant 0.000000e+00 : f32
    %17 = vector.broadcast %cst_11 : f32 to vector<1x8xf32>
    %18 = arith.subf %17, %16 : vector<1x8xf32>
    %19 = math.exp %18 : vector<1x8xf32>
    %cst_12 = arith.constant 1.000000e+00 : f32
    %20 = vector.broadcast %cst_12 : f32 to vector<1x8xf32>
    %21 = arith.addf %20, %19 : vector<1x8xf32>
    %22 = tpu.reciprocal %21 : vector<1x8xf32> -> vector<1x8xf32>
    %23 = vector.shape_cast %22 : vector<1x8xf32> to vector<1x8x1xf32>
    %c0_i32_13 = arith.constant 0 : i32
    %c256_i32_14 = arith.constant 256 : i32
    %24 = arith.muli %c0_i32_13, %c256_i32_14 : i32
    %25 = tpu.assume_multiple %24, 128 : i32
    %c0_15 = arith.constant 0 : index
    %c0_16 = arith.constant 0 : index
    %26 = arith.index_cast %25 : i32 to index
    %27 = vector.load %arg1[%c0_15, %c0_16, %26] : memref<1x8x256xf32, #tpu.memory_space<vmem>>, vector<1x8x256xf32>
    %28 = vector.broadcast %23 : vector<1x8x1xf32> to vector<1x8x256xf32>
    %29 = arith.mulf %27, %28 : vector<1x8x256xf32>
    %c0_17 = arith.constant 0 : index
    %c0_18 = arith.constant 0 : index
    %30 = arith.index_cast %25 : i32 to index
    %31 = vector.load %arg4[%c0_17, %c0_18, %30] : memref<1x8x256xf32, #tpu.memory_space<vmem>>, vector<1x8x256xf32>
    tpu.vector_store %arg4[%c0_17, %c0_18, %30], %29 {strides = array<i32>} : memref<1x8x256xf32, #tpu.memory_space<vmem>>, vector<1x8x256xf32>,
    %c1_i32_19 = arith.constant 1 : i32
    return
  }
  func.func @transform_0(%arg0: i32) -> (i32, i32, i32) {
    %c0_i32 = arith.constant 0 : i32
    %c0_i32_0 = arith.constant 0 : i32
    %c0_i32_1 = arith.constant 0 : i32
    return %arg0, %c0_i32, %c0_i32_0 : i32, i32, i32
  }
  func.func @transform_1(%arg0: i32) -> (i32, i32) {
    %c0_i32 = arith.constant 0 : i32
    %c0_i32_0 = arith.constant 0 : i32
    %c0_i32_1 = arith.constant 0 : i32
    return %c0_i32, %c0_i32_0 : i32, i32
  }
  func.func @transform_2(%arg0: i32) -> (i32, i32) {
    %c0_i32 = arith.constant 0 : i32
    %c0_i32_0 = arith.constant 0 : i32
    %c0_i32_1 = arith.constant 0 : i32
    return %c0_i32, %c0_i32_0 : i32, i32
  }
  func.func @transform_3(%arg0: i32) -> (i32, i32, i32) {
    %c0_i32 = arith.constant 0 : i32
    %c0_i32_0 = arith.constant 0 : i32
    %c0_i32_1 = arith.constant 0 : i32
    return %arg0, %c0_i32, %c0_i32_0 : i32, i32, i32
  }
}

</mosaic_0001>

<llo_original>
// kernel: tpu_custom_call.1
$region0: #{tpu_custom_call.1}
  #allocation0 [shape = 'u32[]', space=smem, size = 0x4, offset = 0x4, fixed_abs, tag = 'smem constant byte address 0x4 - core index']
  #allocation1 [shape = 'u32[144,128]{1,0:T(1,128)}', space=vmem, size = 0x12000, scoped, tag = 'internal scratch']
  %s0 = inlined_call_operand.hbm [shape: f32[2,8,256], index: 0, kind: input, shape index: {}]
  %s1 = inlined_call_operand.vmem [shape: f32[8,2], index: 1, kind: input, shape index: {}]
  %s2 = inlined_call_operand.vmem [shape: f32[2,8], index: 2, kind: input, shape index: {}]
  %s3 = inlined_call_operand.hbm [shape: f32[2,8,256], index: 3, kind: output, shape index: {}]
  %s4 = sld [smem:[#allocation0]]
  $region49: #{tpu_custom_call.1} parent=0
    _
  %s6 = ssub.s32 1, %s4
  %s7 = scalar_select 0, %s6, %s4
  $region1: #{tpu_custom_call.1} parent=0
    #allocation2 [shape = 'u8[16384]{0}', space=vmem, size = 0x4000, scoped, tag = 'input window, operand 0']
    #allocation3 [shape = 's32[2]{0}', space=sflag, size = 0x8, scoped, tag = 'scoped memory for tpu_custom_call.1']
    #allocation4 [shape = 's32[2]{0}', space=sflag, size = 0x8, scoped, tag = 'scoped memory for tpu_custom_call.1']
    #allocation5 [shape = 'u8[16384]{0}', space=vmem, size = 0x4000, scoped, tag = 'output window, operand 0']
    %8 = vsyncpa [#allocation3], 0
    %s9 = scalar_lea.sflag [#allocation3], 1
    %10 = vsyncpa %s9, 0
    %11 = vsyncpa [#allocation4], 0
    %s12 = scalar_lea.sflag [#allocation4], 1
    %13 = vsyncpa %s12, 0
    loop: start=0, step=1, limit=4
    $region2: #{tpu_custom_call.1} parent=1 // loop_pre_header
      _
    $region3: #{tpu_custom_call.1} parent=1 // loop_header
      %s15 = sphi 0, %s19
      %p16 = scmp.ge.s32.totalorder %s15, 4
      %s25 = sphi 0, %s27
      %s28 = sphi 0, %s25
      %s29 = sphi 0, %s28
      %s45 = sphi 0, %s29
      %s49 = sphi 0, %s49
      %s51 = sphi 0, %s49
      %s52 = sphi 0, %s51
      %s66 = sphi 0, %s52
      %s70 = sphi 0, %s70
      %s72 = sphi 0, %s70
      %s73 = sphi 0, %s72
      %s87 = sphi 0, %s73
      %s93 = sphi 0, %s95
      %s96 = sphi 0, %s93
      %s97 = sphi 0, %s96
      %s113 = sphi 0, %s97
    $region4: #{tpu_custom_call.1} parent=1 // loop_header_branch
      %18 = sbr.rel (%p16) target = $region8
    $region5: #{tpu_custom_call.1} parent=1 // loop_body
      %s20 = ssub.s32 %s15, 1
      %s21 = ssub.s32 %s15, 2
      %s22 = sadd.s32 %s15, 1
      %s23 = ssub.s32 %s15, %s22
      %p24 = scmp.eq.s32.totalorder %s23, 0
      %s26 = sadd.s32 %s25, 1
      %s27 = scalar_select %p24, %s25, %s26
      %p30 = pneg %p24
      %p31 = scmp.eq.s32.totalorder %s15, 1
      %p32 = por %p30, %p31
      %p33 = scmp.ne.s32.totalorder %s25, %s28
      %p34 = scmp.eq.s32.totalorder %s15, 0
      %p35 = por %p33, %p34
      %p36 = scmp.ne.s32.totalorder %s25, %s28
      %p37 = scmp.eq.s32.totalorder %s20, 1
      %p38 = por %p36, %p37
      %p39 = scmp.ne.s32.totalorder %s28, %s29
      %p40 = scmp.eq.s32.totalorder %s20, 0
      %p41 = por %p39, %p40
      %p42 = scmp.ne.s32.totalorder %s28, %s29
      %p43 = scmp.eq.s32.totalorder %s21, 1
      %p44 = por %p42, %p43
      %p46 = scmp.ne.s32.totalorder %s29, %s45
      %p47 = scmp.eq.s32.totalorder %s21, 0
      %p48 = por %p46, %p47
      %s50 = sadd.s32 %s49, 1
      %p53 = scmp.eq.s32.totalorder %s15, 1
      %p54 = scmp.ne.s32.totalorder %s49, %s51
      %p55 = scmp.eq.s32.totalorder %s15, 0
      %p56 = por %p54, %p55
      %p57 = scmp.ne.s32.totalorder %s49, %s51
      %p58 = scmp.eq.s32.totalorder %s20, 1
      %p59 = por %p57, %p58
      %p60 = scmp.ne.s32.totalorder %s51, %s52
      %p61 = scmp.eq.s32.totalorder %s20, 0
      %p62 = por %p60, %p61
      %p63 = scmp.ne.s32.totalorder %s51, %s52
      %p64 = scmp.eq.s32.totalorder %s21, 1
      %p65 = por %p63, %p64
      %p67 = scmp.ne.s32.totalorder %s52, %s66
      %p68 = scmp.eq.s32.totalorder %s21, 0
      %p69 = por %p67, %p68
      %s71 = sadd.s32 %s70, 1
      %p74 = scmp.eq.s32.totalorder %s15, 1
      %p75 = scmp.ne.s32.totalorder %s70, %s72
      %p76 = scmp.eq.s32.totalorder %s15, 0
      %p77 = por %p75, %p76
      %p78 = scmp.ne.s32.totalorder %s70, %s72
      %p79 = scmp.eq.s32.totalorder %s20, 1
      %p80 = por %p78, %p79
      %p81 = scmp.ne.s32.totalorder %s72, %s73
      %p82 = scmp.eq.s32.totalorder %s20, 0
      %p83 = por %p81, %p82
      %p84 = scmp.ne.s32.totalorder %s72, %s73
      %p85 = scmp.eq.s32.totalorder %s21, 1
      %p86 = por %p84, %p85
      %p88 = scmp.ne.s32.totalorder %s73, %s87
      %p89 = scmp.eq.s32.totalorder %s21, 0
      %p90 = por %p88, %p89
      %s91 = ssub.s32 %s15, %s22
      %p92 = scmp.eq.s32.totalorder %s91, 0
      %s94 = sadd.s32 %s93, 1
      %s95 = scalar_select %p92, %s93, %s94
      %p98 = pneg %p92
      %p99 = scmp.eq.s32.totalorder %s15, 1
      %p100 = por %p98, %p99
      %p101 = scmp.ne.s32.totalorder %s93, %s96
      %p102 = scmp.eq.s32.totalorder %s15, 0
      %p103 = por %p101, %p102
      %p104 = scmp.ne.s32.totalorder %s93, %s96
      %p105 = scmp.eq.s32.totalorder %s20, 1
      %p106 = por %p104, %p105
      %p107 = scmp.ne.s32.totalorder %s96, %s97
      %p108 = scmp.eq.s32.totalorder %s20, 0
      %p109 = por %p107, %p108
      %p110 = scmp.ne.s32.totalorder %s96, %s97
      %p111 = scmp.eq.s32.totalorder %s21, 1
      %p112 = por %p110, %p111
      %p114 = scmp.ne.s32.totalorder %s97, %s113
      %p115 = scmp.eq.s32.totalorder %s21, 0
      %p116 = por %p114, %p115
      %p117 = scmp.le.s32.totalorder 1, %s15
      %p118 = scmp.lt.s32.totalorder %s15, 3
      %p119 = pnand %p117, %p118
      %p120 = pneg %p119
      // Predicated region
      $region9: #{tpu_custom_call.1} parent=5 // pred_check
        _
      $region10: #{tpu_custom_call.1} parent=5 // pred_check_branch
        %122 = sbr.rel (%p119) target = $region12
      $region11: #{tpu_custom_call.1} parent=5 // pred_region
        %s123 = ssub.s32 %s15, 1
        // Predicated region
        $region13: #{tpu_custom_call.1} parent=11 // pred_check
          %p124 = pneg %p62
        $region14: #{tpu_custom_call.1} parent=11 // pred_check_branch
          %126 = sbr.rel (%p124) target = $region16
        $region15: #{tpu_custom_call.1} parent=11 // pred_region
          _
        $region16: #{tpu_custom_call.1} parent=11 // pred_fallthru
          _
        // Predicated region
        $region17: #{tpu_custom_call.1} parent=11 // pred_check
          %p127 = pneg %p83
        $region18: #{tpu_custom_call.1} parent=11 // pred_check_branch
          %129 = sbr.rel (%p127) target = $region20
        $region19: #{tpu_custom_call.1} parent=11 // pred_region
          _
        $region20: #{tpu_custom_call.1} parent=11 // pred_fallthru
          _
      $region12: #{tpu_custom_call.1} parent=5 // pred_fallthru
        _
      %p130 = scmp.lt.s32.totalorder %s15, 2
      // Predicated region
      $region21: #{tpu_custom_call.1} parent=5 // pred_check
        %p131 = pneg %p130
      $region22: #{tpu_custom_call.1} parent=5 // pred_check_branch
        %133 = sbr.rel (%p131) target = $region24
      $region23: #{tpu_custom_call.1} parent=5 // pred_region
        // Predicated region
        $region25: #{tpu_custom_call.1} parent=23 // pred_check
          %p134 = pneg %p35
        $region26: #{tpu_custom_call.1} parent=23 // pred_check_branch
          %136 = sbr.rel (%p134) target = $region28
        $region27: #{tpu_custom_call.1} parent=23 // pred_region
          %s137 = sand.u32 %s25, 1
          %s138 = scalar_lea.sflag [#allocation3], %s137
          %s139 = sand.u32 %s25, 1
          %s140 = smul.addr %s139, 16
          %s141 = scalar_lea.vmem [#allocation2], %s140
          %s143 = ssub.s32 256, 256
          %144 = vsyncadd %s138, %s143
          %s145 = smul.addr %s15, 2
          %s146 = smul.addr %s145, 128
          %s147 = scalar_lea.hbm %s0, %s146
          %s149 = sshll.u32 %s141, 4
          %s150 = int_to_ptr.vmem [resolvable:$true] %s149
          %152 = dma.hbm_to_vmem [thread:$0]  %s147, 256, %s150, %s138
        $region28: #{tpu_custom_call.1} parent=23 // pred_fallthru
          _
      $region24: #{tpu_custom_call.1} parent=5 // pred_fallthru
        _
      %p153 = scmp.le.s32.totalorder 1, %s15
      %p154 = scmp.lt.s32.totalorder %s15, 3
      %p155 = pnand %p153, %p154
      %p156 = pneg %p155
      // Predicated region
      $region29: #{tpu_custom_call.1} parent=5 // pred_check
        _
      $region30: #{tpu_custom_call.1} parent=5 // pred_check_branch
        %158 = sbr.rel (%p155) target = $region32
      $region31: #{tpu_custom_call.1} parent=5 // pred_region
        %s159 = ssub.s32 %s15, 1
        %s160 = sand.u32 %s28, 1
        %s161 = scalar_lea.sflag [#allocation3], %s160
        %s162 = sand.u32 %s28, 1
        %s163 = smul.addr %s162, 16
        %s164 = scalar_lea.vmem [#allocation2], %s163
        // Predicated region
        $region33: #{tpu_custom_call.1} parent=31 // pred_check
          %p165 = pneg %p41
        $region34: #{tpu_custom_call.1} parent=31 // pred_check_branch
          %167 = sbr.rel (%p165) target = $region36
        $region35: #{tpu_custom_call.1} parent=31 // pred_region
          %168 = dma.done %s161, 256
        $region36: #{tpu_custom_call.1} parent=31 // pred_fallthru
          _
        %s169 = sand.u32 %s28, 1
        %s170 = scalar_lea.sflag [#allocation3], %s169
        %s171 = sand.u32 %s28, 1
        %s172 = smul.addr %s171, 16
        %s173 = scalar_lea.vmem [#allocation2], %s172
        %p174 = pneg %p41
        %p175 = pneg %p38
        %p176 = pneg %p62
        %p177 = pneg %p59
        %p178 = pneg %p83
        %p179 = pneg %p80
        %p180 = pneg %p109
        %p181 = pneg %p106
        %s182 = sand.u32 %s96, 1
        %s183 = scalar_lea.sflag [#allocation4], %s182
        %s184 = sand.u32 %s96, 1
        %s185 = smul.addr %s184, 16
        %s186 = scalar_lea.vmem [#allocation5], %s185
        %v187 = vld [vmem:[%s164] sm:$0xff]
        %v188 = vld [vmem:[%s164 + $0x8] sm:$0xff]
        %v189 = vadd.f32 %v187, 0.0
        %v190 = vadd.f32 %v188, 0.0
        %v191 = vadd.f32 %v189, %v190
        %192 = vadd.xlane.f32.xlu0 %v191
        %v193 = vpop.xlane.xlu0 %192
        %v194 = vadd.f32 %v193, 0.0
        %v195 = vmul.f32 %v194, 0.00390625
        %v196 = vld [vmem:[%s1] sm:$0xff]
        %v198 = vlaneseq
        %v199 = vand.u32 %v198, 127
        %v200 = vlaneseq
        %v201 = vshrl.u32 %v200, 7
        %v202 = vsub.s32 %v199, %v201
        %v203 = vrot.slane %v195, %v202
        %vm204 = vcmask 64512
        %v205 = vsel %vm204, %v203, 0
        %207 = vmatprep.subr.mxu0 0.0
        %208 = vmatpush1.msra.mxu0 %v196
        %209 = vmatprep.subr.mxu0 0.0
        %210 = vmatpush1.msra.mxu0 0.0
        %211 = vmatprep.subr.mxu0 0.0
        %212 = vmatpush1.msra.mxu0 0.0
        %213 = vmatprep.subr.mxu0 0.0
        %214 = vmatpush1.msra.mxu0 0.0
        %215 = vmatprep.subr.mxu0 0.0
        %216 = vmatpush1.msra.mxu0 0.0
        %217 = vmatprep.subr.mxu0 0.0
        %218 = vmatpush1.msra.mxu0 0.0
        %219 = vmatprep.subr.mxu0 0.0
        %220 = vmatpush1.msra.mxu0 0.0
        %221 = vmatprep.subr.mxu0 0.0
        %222 = vmatpush1.msra.mxu0 0.0
        %223 = vmatprep.subr.mxu0 0.0
        %224 = vmatpush1.msra.mxu0 0.0
        %225 = vmatprep.subr.mxu0 0.0
        %226 = vmatpush1.msra.mxu0 0.0
        %227 = vmatprep.subr.mxu0 0.0
        %228 = vmatpush1.msra.mxu0 0.0
        %229 = vmatprep.subr.mxu0 0.0
        %230 = vmatpush1.msra.mxu0 0.0
        %231 = vmatprep.subr.mxu0 0.0
        %232 = vmatpush1.msra.mxu0 0.0
        %233 = vmatprep.subr.mxu0 0.0
        %234 = vmatpush1.msra.mxu0 0.0
        %235 = vmatprep.subr.mxu0 0.0
        %236 = vmatpush1.msra.mxu0 0.0
        %237 = vmatprep.subr.mxu0 0.0
        %238 = vmatpush1.msra.mxu0 0.0
        %239 = vmatprep.subr.mxu0 0.0
        %240 = vmatpush1.msra.mxu0 0.0
        %241 = vmatprep.subr.mxu0 0.0
        %242 = vmatpush1.msra.mxu0 0.0
        %243 = vmatprep.subr.mxu0 0.0
        %244 = vmatpush1.msra.mxu0 0.0
        %245 = vmatprep.subr.mxu0 0.0
        %246 = vmatpush1.msra.mxu0 0.0
        %247 = vmatprep.subr.mxu0 0.0
        %248 = vmatpush1.msra.mxu0 0.0
        %249 = vmatprep.subr.mxu0 0.0
        %250 = vmatpush1.msra.mxu0 0.0
        %251 = vmatprep.subr.mxu0 0.0
        %252 = vmatpush1.msra.mxu0 0.0
        %253 = vmatprep.subr.mxu0 0.0
        %254 = vmatpush1.msra.mxu0 0.0
        %255 = vmatprep.subr.mxu0 0.0
        %256 = vmatpush1.msra.mxu0 0.0
        %257 = vmatprep.subr.mxu0 0.0
        %258 = vmatpush1.msra.mxu0 0.0
        %259 = vmatprep.subr.mxu0 0.0
        %260 = vmatpush1.msra.mxu0 0.0
        %261 = vmatprep.subr.mxu0 0.0
        %262 = vmatpush1.msra.mxu0 0.0
        %263 = vmatprep.subr.mxu0 0.0
        %264 = vmatpush1.msra.mxu0 0.0
        %265 = vmatprep.subr.mxu0 0.0
        %266 = vmatpush1.msra.mxu0 0.0
        %267 = vmatprep.subr.mxu0 0.0
        %268 = vmatpush1.msra.mxu0 0.0
        %269 = vmatprep.subr.mxu0 0.0
        %270 = vmatpush1.msra.mxu0 0.0
        %271 = vmatprep.mubr.f32.mxu0 0.0
        %272 = vmatmul.mubr.f32.gmra.mrb[0].mxu0 %v205
        %v273 = vpop.f32.mrb[0].mxu0
        %v274 = vadd.f32 0.0, %v273
        %v275 = vpop.f32.mrb[0].mxu0
        %276 = vdwg.mxu0
        %v277 = vmax.f32 %v274, 0.0
        %v278 = vld [vmem:[%s2] sm:$0x3]
        %vm279 = vcmask 15360
        %v281 = vsel %vm279, %v277, 0
        %vm283 = vcmask 1041408
        %v285 = vsel %vm283, %v278, 0
        %287 = vmatprep.subr.mxu0 0.0
        %288 = vmatpush1.msra.mxu0 %v285
        %289 = vmatprep.subr.mxu0 0.0
        %290 = vmatpush1.msra.mxu0 0.0
        %291 = vmatprep.subr.mxu0 0.0
        %292 = vmatpush1.msra.mxu0 0.0
        %293 = vmatprep.subr.mxu0 0.0
        %294 = vmatpush1.msra.mxu0 0.0
        %295 = vmatprep.subr.mxu0 0.0
        %296 = vmatpush1.msra.mxu0 0.0
        %297 = vmatprep.subr.mxu0 0.0
        %298 = vmatpush1.msra.mxu0 0.0
        %299 = vmatprep.subr.mxu0 0.0
        %300 = vmatpush1.msra.mxu0 0.0
        %301 = vmatprep.subr.mxu0 0.0
        %302 = vmatpush1.msra.mxu0 0.0
        %303 = vmatprep.subr.mxu0 0.0
        %304 = vmatpush1.msra.mxu0 0.0
        %305 = vmatprep.subr.mxu0 0.0
        %306 = vmatpush1.msra.mxu0 0.0
        %307 = vmatprep.subr.mxu0 0.0
        %308 = vmatpush1.msra.mxu0 0.0
        %309 = vmatprep.subr.mxu0 0.0
        %310 = vmatpush1.msra.mxu0 0.0
        %311 = vmatprep.subr.mxu0 0.0
        %312 = vmatpush1.msra.mxu0 0.0
        %313 = vmatprep.subr.mxu0 0.0
        %314 = vmatpush1.msra.mxu0 0.0
        %315 = vmatprep.subr.mxu0 0.0
        %316 = vmatpush1.msra.mxu0 0.0
        %317 = vmatprep.subr.mxu0 0.0
        %318 = vmatpush1.msra.mxu0 0.0
        %319 = vmatprep.subr.mxu0 0.0
        %320 = vmatpush1.msra.mxu0 0.0
        %321 = vmatprep.subr.mxu0 0.0
        %322 = vmatpush1.msra.mxu0 0.0
        %323 = vmatprep.subr.mxu0 0.0
        %324 = vmatpush1.msra.mxu0 0.0
        %325 = vmatprep.subr.mxu0 0.0
        %326 = vmatpush1.msra.mxu0 0.0
        %327 = vmatprep.subr.mxu0 0.0
        %328 = vmatpush1.msra.mxu0 0.0
        %329 = vmatprep.subr.mxu0 0.0
        %330 = vmatpush1.msra.mxu0 0.0
        %331 = vmatprep.subr.mxu0 0.0
        %332 = vmatpush1.msra.mxu0 0.0
        %333 = vmatprep.subr.mxu0 0.0
        %334 = vmatpush1.msra.mxu0 0.0
        %335 = vmatprep.subr.mxu0 0.0
        %336 = vmatpush1.msra.mxu0 0.0
        %337 = vmatprep.subr.mxu0 0.0
        %338 = vmatpush1.msra.mxu0 0.0
        %339 = vmatprep.subr.mxu0 0.0
        %340 = vmatpush1.msra.mxu0 0.0
        %341 = vmatprep.subr.mxu0 0.0
        %342 = vmatpush1.msra.mxu0 0.0
        %343 = vmatprep.subr.mxu0 0.0
        %344 = vmatpush1.msra.mxu0 0.0
        %345 = vmatprep.subr.mxu0 0.0
        %346 = vmatpush1.msra.mxu0 0.0
        %347 = vmatprep.subr.mxu0 0.0
        %348 = vmatpush1.msra.mxu0 0.0
        %349 = vmatprep.subr.mxu0 0.0
        %350 = vmatpush1.msra.mxu0 0.0
        %351 = vmatprep.mubr.f32.mxu0 0.0
        %352 = vmatmul.mubr.f32.gmra.mrb[0].mxu0 %v281
        %v353 = vpop.f32.mrb[0].mxu0
        %v354 = vadd.f32 0.0, %v353
        %v355 = vpop.f32.mrb[0].mxu0
        %356 = vdwg.mxu0
        %v357 = vsub.f32 0.0, %v354
        %v358 = vmul.f32 %v357, 1.442695
        %v359 = vpow.pop %v358
        %v360 = vadd.f32 %v359, 1.0
        %v361 = vrcp.pop %v360
        %v362 = vlaneseq
        %v363 = vshrl.u32 %v362, 7
        %v364 = vsub.s32 0, %v363
        %v365 = vrot.slane %v361, %v364
        %367 = vbcast.lane.b32.xlu0 %v365, 256
        %v368 = vpop.permute.xlu0 %367
        %v369 = vmul.f32 %v187, %v368
        %v370 = vmul.f32 %v188, %v368
        %371 = vst [vmem:[%s186] sm:$0xff] %v369
        %372 = vst [vmem:[%s186 + $0x8] sm:$0xff] %v370
        %s373 = sand.u32 %s96, 1
        %s374 = scalar_lea.sflag [#allocation4], %s373
        %s375 = sand.u32 %s96, 1
        %s376 = smul.addr %s375, 16
        %s377 = scalar_lea.vmem [#allocation5], %s376
        // Predicated region
        $region37: #{tpu_custom_call.1} parent=31 // pred_check
          %p378 = pneg %p106
        $region38: #{tpu_custom_call.1} parent=31 // pred_check_branch
          %380 = sbr.rel (%p378) target = $region40
        $region39: #{tpu_custom_call.1} parent=31 // pred_region
          %s382 = ssub.s32 256, 256
          %383 = vsyncadd %s374, %s382
          %s384 = smul.addr %s20, 2
          %s385 = smul.addr %s384, 128
          %s386 = scalar_lea.hbm %s3, %s385
          %s388 = sshll.u32 %s377, 4
          %s389 = int_to_ptr.vmem [resolvable:$true] %s388
          %391 = dma.vmem_to_hbm [thread:$0]  %s389, 256, %s386, %s374
        $region40: #{tpu_custom_call.1} parent=31 // pred_fallthru
          _
      $region32: #{tpu_custom_call.1} parent=5 // pred_fallthru
        _
      %p392 = scmp.le.s32.totalorder 2, %s15
      // Predicated region
      $region41: #{tpu_custom_call.1} parent=5 // pred_check
        %p393 = pneg %p392
      $region42: #{tpu_custom_call.1} parent=5 // pred_check_branch
        %395 = sbr.rel (%p393) target = $region44
      $region43: #{tpu_custom_call.1} parent=5 // pred_region
        %s396 = ssub.s32 %s15, 2
        // Predicated region
        $region45: #{tpu_custom_call.1} parent=43 // pred_check
          %p397 = pneg %p112
        $region46: #{tpu_custom_call.1} parent=43 // pred_check_branch
          %399 = sbr.rel (%p397) target = $region48
        $region47: #{tpu_custom_call.1} parent=43 // pred_region
          %s400 = sand.u32 %s97, 1
          %s401 = scalar_lea.sflag [#allocation4], %s400
          %s402 = sand.u32 %s97, 1
          %s403 = smul.addr %s402, 16
          %s404 = scalar_lea.vmem [#allocation5], %s403
          %405 = dma.done %s401, 256
        $region48: #{tpu_custom_call.1} parent=43 // pred_fallthru
          _
      $region44: #{tpu_custom_call.1} parent=5 // pred_fallthru
        _
    $region6: #{tpu_custom_call.1} parent=1 // loop_footer
      %s19 = sadd.s32 1, %s15
    $region7: #{tpu_custom_call.1} parent=1 // loop_footer_branch
      %14 = sbr.rel target = $region3
    $region8: #{tpu_custom_call.1} parent=1 // loop_exit
      _
    %406 = vsyncpa [#allocation3], 1
    %s407 = scalar_lea.sflag [#allocation3], 1
    %408 = vsyncpa %s407, 1
    %409 = vsyncpa [#allocation4], 1
    %s410 = scalar_lea.sflag [#allocation4], 1
    %411 = vsyncpa %s410, 1

</llo_original>
